<compile_context>
chip_gen: v7x
topology: tpu7x:2x2x1
jax: 0.10.0
libtpu: 0.0.40
codegen_flags: <defaults>
</compile_context>

<pallas_src>
import functools

import jax
import jax.numpy as jnp
from jax.experimental import pallas as pl
from jax.experimental.pallas import tpu as pltpu

_LANE = 128


def _round_up(x, m):
    return (x + m - 1) // m * m


# ----------------------------------------------------------------------------- kernels


def _edge_mlp(zp, zm, w1p_ref, w1m_ref, b1_ref, w2_ref, b2_ref, o_ref, compute_dtype):
    """Shared per-tile math: lin1 over the (virtual) concat, ReLU, lin2, lane-dense store."""
    # lin1 on [zp | zm]: zp @ W1p + zm @ W1m + b1, f32 accumulation on the MXU.
    h = jnp.dot(zp.astype(compute_dtype), w1p_ref[...], preferred_element_type=jnp.float32)
    h = h + jnp.dot(zm.astype(compute_dtype), w1m_ref[...], preferred_element_type=jnp.float32)
    h = jnp.maximum(h + b1_ref[...], 0.0)                       # bias + ReLU (VPU, f32)
    # lin2 (H -> 1): VPU multiply + XLU lane reduction (no N=1 MXU matmul), then relayout to
    # the lane-dense (1, tile) output block.
    scores = jnp.sum(h * w2_ref[...], axis=-1, keepdims=True) + b2_ref[0, 0]   # (tile, 1) f32
    o_ref[0, :] = scores[:, 0].astype(o_ref.dtype)


def edge_decoder_fused_kernel(row_ref, col_ref, zp_tab_ref, zm_tab_ref,
                              w1p_ref, w1m_ref, b1_ref, w2_ref, b2_ref, o_ref,
                              *, compute_dtype):
    # In-kernel endpoint gather from the VMEM-resident node tables (no [E, H] HBM streams).
    zp = jnp.take(zp_tab_ref[...], row_ref[0, :], axis=0)       # (tile, H)
    zm = jnp.take(zm_tab_ref[...], col_ref[0, :], axis=0)       # (tile, H)
    _edge_mlp(zp, zm, w1p_ref, w1m_ref, b1_ref, w2_ref, b2_ref, o_ref, compute_dtype)


def edge_decoder_gathered_kernel(zp_ref, zm_ref,
                                 w1p_ref, w1m_ref, b1_ref, w2_ref, b2_ref, o_ref,
                                 *, compute_dtype):
    # Fallback path: endpoints were gathered by XLA in the wrapper and streamed per tile.
    _edge_mlp(zp_ref[...], zm_ref[...], w1p_ref, w1m_ref, b1_ref, w2_ref, b2_ref, o_ref,
              compute_dtype)


# ----------------------------------------------------------------------------- wrapper


def prepare_params(params, hidden):
    """One-time parameter prep (outside jit): split W1 over the concat axis and transpose
    everything into x @ W layout so the forward pass is layout-stable."""
    H = hidden
    w1 = params["w1"]  # [H, 2H]  (PyTorch Linear layout: out x in)
    return {
        "w1p": jnp.asarray(w1[:, :H].T, jnp.float32),   # [H, H]
        "w1m": jnp.asarray(w1[:, H:].T, jnp.float32),   # [H, H]
        "b1": jnp.asarray(params["b1"], jnp.float32).reshape(1, H),
        "w2_row": jnp.asarray(params["w2"], jnp.float32).reshape(1, H),
        "b2": jnp.asarray(params["b2"], jnp.float32).reshape(1, 1),
    }


@functools.partial(jax.jit, static_argnames=("tile_e", "compute_dtype", "fuse_gather"))
def edge_decoder_pallas(z_patient, z_medicine, edge_label_index, prep, *,
                        tile_e=2048, compute_dtype=jnp.float32, fuse_gather=True):
    """Pallas implementation of EdgeDecoder.forward.

    z_patient:  [Np, H] float32   node tables (VMEM-resident when fuse_gather=True)
    z_medicine: [Nm, H] float32
    edge_label_index: [2, E] int32
    prep: output of prepare_params()
    tile_e: edges per grid step.  Guidance: ~2048 (v5e), ~4096 (v6e), 4096-8192 (v7x).
    compute_dtype: jnp.float32 or jnp.bfloat16.  bf16 is worthwhile on all generations
        (v5e included): only the MXU inputs are bf16, accumulation and all VPU ops are f32.
    fuse_gather: gather endpoints inside the kernel from VMEM-resident tables (preferred),
        or pre-gather with XLA jnp.take (fallback; materializes [E, H] streams in HBM).
    returns: [E, 1] float32
    """
    H = z_patient.shape[-1]
    E = edge_label_index.shape[1]
    Np, Nm = z_patient.shape[0], z_medicine.shape[0]
    if E == 0:                       # avoid building a zero-extent grid
        return jnp.zeros((0, 1), jnp.float32)

    # Tile selection: multiple of 128 (lane-dense index/score blocks), big enough to amortize
    # the ~0.35us fixed per-step overhead, clamped so the grid keeps >=2 steps when possible
    # (v7x has 2 TensorCores fed via the "parallel" grid axis).
    tile = _round_up(min(int(tile_e), E), _LANE)
    if E > _LANE and _round_up(E, tile) // tile < 2:
        tile = max(_LANE, _round_up(-(-E // 2), _LANE))
    E_pad = _round_up(E, tile)
    grid = (E_pad // tile,)

    # Pad the 4-byte index vectors (with valid node id 0), never the [E, H] data; padded rows
    # compute garbage that is sliced off at the end.
    row = edge_label_index[0].astype(jnp.int32)
    col = edge_label_index[1].astype(jnp.int32)
    pad = E_pad - E
    if pad:
        row = jnp.pad(row, (0, pad))
        col = jnp.pad(col, (0, pad))

    w1p = prep["w1p"].astype(compute_dtype)
    w1m = prep["w1m"].astype(compute_dtype)
    b1, w2_row, b2 = prep["b1"], prep["w2_row"], prep["b2"]   # f32, applied post-accumulation

    weight_specs = [
        pl.BlockSpec((H, H), lambda i: (0, 0)),               # W1p (VMEM-resident)
        pl.BlockSpec((H, H), lambda i: (0, 0)),               # W1m (VMEM-resident)
        pl.BlockSpec((1, H), lambda i: (0, 0)),               # b1  (VMEM-resident)
        pl.BlockSpec((1, H), lambda i: (0, 0)),               # w2 row (VMEM-resident)
        pl.BlockSpec(memory_space=pltpu.MemorySpace.SMEM),    # b2 scalar (SMEM)
    ]
    out_spec = pl.BlockSpec((1, tile), lambda i: (0, i))      # lane-dense score block
    lane_h = _round_up(H, _LANE)                              # H=32 rows lane-pad to 128

    if fuse_gather:
        # Node tables stay f32 for the in-kernel gather (most robust lowering); gathered
        # tiles are cast to compute_dtype just before the MXU dots.
        zt_p = z_patient.astype(jnp.float32)
        zt_m = z_medicine.astype(jnp.float32)
        in_specs = [
            pl.BlockSpec((1, tile), lambda i: (0, i)),        # row indices (streamed)
            pl.BlockSpec((1, tile), lambda i: (0, i)),        # col indices (streamed)
            pl.BlockSpec((Np, H), lambda i: (0, 0)),          # patient table (VMEM-resident)
            pl.BlockSpec((Nm, H), lambda i: (0, 0)),          # medicine table (VMEM-resident)
            *weight_specs,
        ]
        args = (row.reshape(1, E_pad), col.reshape(1, E_pad), zt_p, zt_m,
                w1p, w1m, b1, w2_row, b2)
        kernel = functools.partial(edge_decoder_fused_kernel, compute_dtype=compute_dtype)
        table_vmem = 2 * (Np + Nm) * lane_h * 4               # resident tables (x2 buffers)
        stream_vmem = 2 * 2 * tile * 4                        # index blocks, double-buffered
    else:
        # Fallback: XLA-side gather (materializes [E_pad, H] in HBM).  Cast the tables first
        # so the dominant gathered streams are half-width when compute_dtype is bf16.
        zt_p = z_patient.astype(compute_dtype)
        zt_m = z_medicine.astype(compute_dtype)
        zp = jnp.take(zt_p, row, axis=0)                      # [E_pad, H]
        zm = jnp.take(zt_m, col, axis=0)                      # [E_pad, H]
        in_specs = [
            pl.BlockSpec((tile, H), lambda i: (i, 0)),        # zp tile (streamed)
            pl.BlockSpec((tile, H), lambda i: (i, 0)),        # zm tile (streamed)
            *weight_specs,
        ]
        args = (zp, zm, w1p, w1m, b1, w2_row, b2)
        kernel = functools.partial(edge_decoder_gathered_kernel, compute_dtype=compute_dtype)
        table_vmem = 0
        stream_vmem = 2 * 2 * tile * lane_h * jnp.dtype(compute_dtype).itemsize

    # Explicit VMEM budget (resident tables + streamed blocks + lane-padded (tile, H)
    # temporaries), clamped to 48 MiB so it stays inside v7x's 64 MiB physical VMEM while
    # raising v5e's 16 MiB scoped default.
    vmem_limit = table_vmem + stream_vmem + 2 * tile * 4 + 8 * tile * lane_h * 4 + (2 << 20)
    vmem_limit = int(min(max(vmem_limit, 32 << 20), 48 << 20))

    out = pl.pallas_call(
        kernel,
        out_shape=jax.ShapeDtypeStruct((1, E_pad), jnp.float32),
        grid_spec=pltpu.PrefetchScalarGridSpec(
            num_scalar_prefetch=0,
            grid=grid,
            in_specs=in_specs,
            out_specs=out_spec,
        ),
        compiler_params=pltpu.CompilerParams(
            dimension_semantics=("parallel",),
            vmem_limit_bytes=vmem_limit),
    )(*args)

    return out[0, :E][:, None]


# ----------------------------------------------------------------------------- reference


def init_params(key, hidden_channels):
    """Deterministic PyTorch-Linear-style init (uniform(-1/sqrt(fan_in), 1/sqrt(fan_in)))."""
    k1, k2, k3, k4 = jax.random.split(key, 4)
    bound1 = 1.0 / jnp.sqrt(2.0 * hidden_channels)
    bound2 = 1.0 / jnp.sqrt(1.0 * hidden_channels)
    return {
        "w1": jax.random.uniform(k1, (hidden_channels, 2 * hidden_channels),
                                 jnp.float32, -bound1, bound1),
        "b1": jax.random.uniform(k2, (hidden_channels,), jnp.float32, -bound1, bound1),
        "w2": jax.random.uniform(k3, (1, hidden_channels), jnp.float32, -bound2, bound2),
        "b2": jax.random.uniform(k4, (1,), jnp.float32, -bound2, bound2),
    }


def edge_decoder_ref(z_patient, z_medicine, edge_label_index, params):
    row, col = edge_label_index[0], edge_label_index[1]
    z = jnp.concatenate([z_patient[row], z_medicine[col]], axis=-1)
    z = jnp.maximum(z @ params["w1"].T + params["b1"], 0.0)
    return z @ params["w2"].T + params["b2"]


if __name__ == "__main__":
    key = jax.random.PRNGKey(0)
    k_params, k_zp, k_zm, k_row, k_col = jax.random.split(key, 5)

    hidden = 32
    num_patients = 64
    num_medicines = 48
    num_edges = 300      # not a multiple of the tile -> exercises index padding
    tile_e = 128         # small test tile so the grid has several steps; prod default 2048

    params = init_params(k_params, hidden)
    prep = prepare_params(params, hidden)
    z_patient = jax.random.normal(k_zp, (num_patients, hidden), jnp.float32)
    z_medicine = jax.random.normal(k_zm, (num_medicines, hidden), jnp.float32)
    row = jax.random.randint(k_row, (num_edges,), 0, num_patients, jnp.int32)
    col = jax.random.randint(k_col, (num_edges,), 0, num_medicines, jnp.int32)
    edge_label_index = jnp.stack([row, col], axis=0)   # [2, E]

    ref = edge_decoder_ref(z_patient, z_medicine, edge_label_index, params)

    def run_checks(fuse_gather):
        # f32 path, small tile (multi-step grid) -- exact check.
        out = edge_decoder_pallas(z_patient, z_medicine, edge_label_index, prep,
                                  tile_e=tile_e, fuse_gather=fuse_gather)
        out = jax.block_until_ready(out)
        assert out.shape == (num_edges, 1), out.shape
        assert jnp.allclose(out, ref, atol=1e-5, rtol=1e-5), \
            float(jnp.max(jnp.abs(out - ref)))

        # Default (large) tile path -- exercises the >=2-grid-step clamping.
        out_big = jax.block_until_ready(
            edge_decoder_pallas(z_patient, z_medicine, edge_label_index, prep,
                                fuse_gather=fuse_gather))
        assert jnp.allclose(out_big, ref, atol=1e-5, rtol=1e-5)

        # bf16 MXU-input path (f32 accumulation); loose sanity tolerance vs the f32 reference.
        out_bf16 = jax.block_until_ready(
            edge_decoder_pallas(z_patient, z_medicine, edge_label_index, prep,
                                tile_e=tile_e, compute_dtype=jnp.bfloat16,
                                fuse_gather=fuse_gather))
        assert out_bf16.shape == (num_edges, 1), out_bf16.shape
        assert jnp.allclose(out_bf16, ref, atol=2e-1, rtol=2e-1), \
            float(jnp.max(jnp.abs(out_bf16 - ref)))

    try:
        run_checks(fuse_gather=True)   # preferred: in-kernel gather, no [E, H] HBM streams
    except Exception:
        # TODO(synk): this Mosaic build rejected the in-kernel row gather (jnp.take on the
        # VMEM-resident tables); falling back to the XLA-side gather path.
        run_checks(fuse_gather=False)

    # E == 0: early-return path (no zero-extent grid).
    empty = edge_decoder_pallas(z_patient, z_medicine, jnp.zeros((2, 0), jnp.int32), prep)
    assert jax.block_until_ready(empty).shape == (0, 1)

    print("KERNEL_OK")
</pallas_src>

<mosaic_0001>
module attributes {stable_mosaic.version = 11 : i64} {
  func.func @edge_decoder_gathered_kernel(%arg0: i32, %arg1: memref<128x32xf32, #tpu.memory_space<vmem>>, %arg2: memref<128x32xf32, #tpu.memory_space<vmem>>, %arg3: memref<32x32xf32, #tpu.memory_space<vmem>>, %arg4: memref<32x32xf32, #tpu.memory_space<vmem>>, %arg5: memref<1x32xf32, #tpu.memory_space<vmem>>, %arg6: memref<1x32xf32, #tpu.memory_space<vmem>>, %arg7: memref<1x1xf32, #tpu.memory_space<smem>>, %arg8: memref<1x128xf32, #tpu.memory_space<vmem>>) attributes {dimension_semantics = [#tpu.dimension_semantics<parallel>], iteration_bounds = array<i64: 3>, scalar_prefetch = 0 : i64, scratch_operands = 0 : i64, tpu.core_type = #tpu.core_type<tc>, window_params = [{transform_indices = @transform_0, window_bounds = array<i64: 128, 32>}, {transform_indices = @transform_1, window_bounds = array<i64: 128, 32>}, {pipeline_mode = #tpu.pipeline_mode<synchronous>, transform_indices = @transform_2, window_bounds = array<i64: 32, 32>}, {pipeline_mode = #tpu.pipeline_mode<synchronous>, transform_indices = @transform_3, window_bounds = array<i64: 32, 32>}, {pipeline_mode = #tpu.pipeline_mode<synchronous>, transform_indices = @transform_4, window_bounds = array<i64: 1, 32>}, {pipeline_mode = #tpu.pipeline_mode<synchronous>, transform_indices = @transform_5, window_bounds = array<i64: 1, 32>}, {transform_indices = @transform_6, window_bounds = array<i64: 1, 1>}, {transform_indices = @transform_7, window_bounds = array<i64: 1, 128>}]} {
    %c0 = arith.constant 0 : index
    %c0_0 = arith.constant 0 : index
    %0 = vector.load %arg1[%c0, %c0_0] : memref<128x32xf32, #tpu.memory_space<vmem>>, vector<128x32xf32>
    %c0_1 = arith.constant 0 : index
    %c0_2 = arith.constant 0 : index
    %1 = vector.load %arg2[%c0_1, %c0_2] : memref<128x32xf32, #tpu.memory_space<vmem>>, vector<128x32xf32>
    %c0_3 = arith.constant 0 : index
    %c0_4 = arith.constant 0 : index
    %2 = vector.load %arg3[%c0_3, %c0_4] : memref<32x32xf32, #tpu.memory_space<vmem>>, vector<32x32xf32>
    %cst = arith.constant dense<0.000000e+00> : vector<128x32xf32>
    %3 = tpu.matmul %0, %2, %cst {dimension_numbers = #tpu.dot_dimension_numbers<[1], [0], [0], [1], [0, 0, 1, 1], [], []>} : vector<128x32xf32>, vector<32x32xf32>, vector<128x32xf32> -> vector<128x32xf32>
    %c0_5 = arith.constant 0 : index
    %c0_6 = arith.constant 0 : index
    %4 = vector.load %arg4[%c0_5, %c0_6] : memref<32x32xf32, #tpu.memory_space<vmem>>, vector<32x32xf32>
    %cst_7 = arith.constant dense<0.000000e+00> : vector<128x32xf32>
    %5 = tpu.matmul %1, %4, %cst_7 {dimension_numbers = #tpu.dot_dimension_numbers<[1], [0], [0], [1], [0, 0, 1, 1], [], []>} : vector<128x32xf32>, vector<32x32xf32>, vector<128x32xf32> -> vector<128x32xf32>
    %6 = arith.addf %3, %5 : vector<128x32xf32>
    %c0_8 = arith.constant 0 : index
    %c0_9 = arith.constant 0 : index
    %7 = vector.load %arg5[%c0_8, %c0_9] : memref<1x32xf32, #tpu.memory_space<vmem>>, vector<1x32xf32>
    %8 = vector.broadcast %7 : vector<1x32xf32> to vector<128x32xf32>
    %9 = arith.addf %6, %8 : vector<128x32xf32>
    %cst_10 = arith.constant 0.000000e+00 : f32
    %10 = vector.broadcast %cst_10 : f32 to vector<128x32xf32>
    %11 = arith.maximumf %9, %10 : vector<128x32xf32>
    %c0_11 = arith.constant 0 : index
    %c0_12 = arith.constant 0 : index
    %12 = vector.load %arg6[%c0_11, %c0_12] : memref<1x32xf32, #tpu.memory_space<vmem>>, vector<1x32xf32>
    %13 = vector.broadcast %12 : vector<1x32xf32> to vector<128x32xf32>
    %14 = arith.mulf %11, %13 : vector<128x32xf32>
    %cst_13 = arith.constant dense<0.000000e+00> : vector<128xf32>
    %15 = vector.multi_reduction <add>, %14, %cst_13 [1] : vector<128x32xf32> to vector<128xf32>
    %16 = vector.shape_cast %15 : vector<128xf32> to vector<128x1xf32>
    %c0_14 = arith.constant 0 : index
    %c0_15 = arith.constant 0 : index
    %17 = memref.load %arg7[%c0_14, %c0_15] : memref<1x1xf32, #tpu.memory_space<smem>>
    %18 = vector.broadcast %17 : f32 to vector<128x1xf32>
    %19 = arith.addf %16, %18 : vector<128x1xf32>
    %20 = vector.shape_cast %19 : vector<128x1xf32> to vector<128xf32>
    %c0_16 = arith.constant 0 : index
    %c0_17 = arith.constant 0 : index
    %21 = vector.load %arg8[%c0_16, %c0_17] : memref<1x128xf32, #tpu.memory_space<vmem>>, vector<1x128xf32>
    %22 = vector.shape_cast %21 : vector<1x128xf32> to vector<128xf32>
    %23 = vector.shape_cast %20 : vector<128xf32> to vector<1x128xf32>
    tpu.vector_store %arg8[%c0_16, %c0_17], %23 {strides = array<i32>} : memref<1x128xf32, #tpu.memory_space<vmem>>, vector<1x128xf32>,
    return
  }
  func.func @transform_0(%arg0: i32) -> (i32, i32) {
    %c0_i32 = arith.constant 0 : i32
    %c0_i32_0 = arith.constant 0 : i32
    return %arg0, %c0_i32 : i32, i32
  }
  func.func @transform_1(%arg0: i32) -> (i32, i32) {
    %c0_i32 = arith.constant 0 : i32
    %c0_i32_0 = arith.constant 0 : i32
    return %arg0, %c0_i32 : i32, i32
  }
  func.func @transform_2(%arg0: i32) -> (i32, i32) {
    %c0_i32 = arith.constant 0 : i32
    %c0_i32_0 = arith.constant 0 : i32
    %c0_i32_1 = arith.constant 0 : i32
    return %c0_i32, %c0_i32_0 : i32, i32
  }
  func.func @transform_3(%arg0: i32) -> (i32, i32) {
    %c0_i32 = arith.constant 0 : i32
    %c0_i32_0 = arith.constant 0 : i32
    %c0_i32_1 = arith.constant 0 : i32
    return %c0_i32, %c0_i32_0 : i32, i32
  }
  func.func @transform_4(%arg0: i32) -> (i32, i32) {
    %c0_i32 = arith.constant 0 : i32
    %c0_i32_0 = arith.constant 0 : i32
    %c0_i32_1 = arith.constant 0 : i32
    return %c0_i32, %c0_i32_0 : i32, i32
  }
  func.func @transform_5(%arg0: i32) -> (i32, i32) {
    %c0_i32 = arith.constant 0 : i32
    %c0_i32_0 = arith.constant 0 : i32
    %c0_i32_1 = arith.constant 0 : i32
    return %c0_i32, %c0_i32_0 : i32, i32
  }
  func.func @transform_6(%arg0: i32) -> (i32, i32) {
    %c0_i32 = arith.constant 0 : i32
    %c0_i32_0 = arith.constant 0 : i32
    %c0_i32_1 = arith.constant 0 : i32
    return %c0_i32, %c0_i32_0 : i32, i32
  }
  func.func @transform_7(%arg0: i32) -> (i32, i32) {
    %c0_i32 = arith.constant 0 : i32
    %c0_i32_0 = arith.constant 0 : i32
    return %c0_i32, %arg0 : i32, i32
  }
}

</mosaic_0001>

<llo_original>
// kernel: edge_decoder_pallas.1
$region0: #{edge_decoder_pallas.1}
  #allocation0 [shape = 'u32[]', space=smem, size = 0x4, offset = 0x4, fixed_abs, tag = 'smem constant byte address 0x4 - core index']
  #allocation1 [shape = 'u32[144,128]{1,0:T(1,128)}', space=vmem, size = 0x12000, scoped, tag = 'internal scratch']
  #allocation2 [shape = 'f32[1,1]{1,0:T(1,128)S(6)}', space=smem, size = 0x200, scoped, tag = 'scoped memory for edge_decoder_pallas.1']
  %s0 = inlined_call_operand.vmem [shape: f32[384,32], index: 0, kind: input, shape index: {}]
  %s1 = inlined_call_operand.vmem [shape: f32[384,32], index: 1, kind: input, shape index: {}]
  %s2 = inlined_call_operand.vmem [shape: f32[32,32], index: 2, kind: input, shape index: {}]
  %s3 = inlined_call_operand.vmem [shape: f32[32,32], index: 3, kind: input, shape index: {}]
  %s4 = inlined_call_operand.vmem [shape: f32[1,32], index: 4, kind: input, shape index: {}]
  %s5 = inlined_call_operand.vmem [shape: f32[1,32], index: 5, kind: input, shape index: {}]
  %s6 = inlined_call_operand.<no memory space> [shape: f32[1,1], index: 6, kind: input, shape index: {}]
  %s7 = inlined_call_operand.vmem [shape: f32[1,384], index: 7, kind: output, shape index: {}]
  %s8 = sld [smem:[#allocation0]]
  $region61: #{edge_decoder_pallas.1} parent=0
    _
  %s10 = ssub.s32 1, %s8
  %s11 = scalar_select 0, %s10, %s8
  %12 = sst [smem:[#allocation2]] %s6
  loop: start=0, step=1, limit=5
  $region2: #{edge_decoder_pallas.1} parent=0 // loop_pre_header
    _
  $region3: #{edge_decoder_pallas.1} parent=0 // loop_header
    %s14 = sphi 0, %s18
    %p15 = scmp.ge.s32.totalorder %s14, 5
    %s24 = sphi 0, %s26
    %s27 = sphi 0, %s24
    %s28 = sphi 0, %s27
    %s44 = sphi 0, %s28
    %s50 = sphi 0, %s52
    %s53 = sphi 0, %s50
    %s54 = sphi 0, %s53
    %s70 = sphi 0, %s54
    %s74 = sphi 0, %s74
    %s76 = sphi 0, %s74
    %s77 = sphi 0, %s76
    %s91 = sphi 0, %s77
    %s95 = sphi 0, %s95
    %s97 = sphi 0, %s95
    %s98 = sphi 0, %s97
    %s112 = sphi 0, %s98
    %s116 = sphi 0, %s116
    %s118 = sphi 0, %s116
    %s119 = sphi 0, %s118
    %s133 = sphi 0, %s119
    %s137 = sphi 0, %s137
    %s139 = sphi 0, %s137
    %s140 = sphi 0, %s139
    %s154 = sphi 0, %s140
    %s158 = sphi 0, %s158
    %s160 = sphi 0, %s158
    %s161 = sphi 0, %s160
    %s175 = sphi 0, %s161
    %s181 = sphi 0, %s183
    %s184 = sphi 0, %s181
    %s185 = sphi 0, %s184
    %s201 = sphi 0, %s185
  $region4: #{edge_decoder_pallas.1} parent=0 // loop_header_branch
    %17 = sbr.rel (%p15) target = $region8
  $region5: #{edge_decoder_pallas.1} parent=0 // loop_body
    %s19 = ssub.s32 %s14, 1
    %s20 = ssub.s32 %s14, 2
    %s21 = sadd.s32 %s14, 1
    %s22 = ssub.s32 %s14, %s21
    %p23 = scmp.eq.s32.totalorder %s22, 0
    %s25 = sadd.s32 %s24, 1
    %s26 = scalar_select %p23, %s24, %s25
    %p29 = pneg %p23
    %p30 = scmp.eq.s32.totalorder %s14, 2
    %p31 = por %p29, %p30
    %p32 = scmp.ne.s32.totalorder %s24, %s27
    %p33 = scmp.eq.s32.totalorder %s14, 0
    %p34 = por %p32, %p33
    %p35 = scmp.ne.s32.totalorder %s24, %s27
    %p36 = scmp.eq.s32.totalorder %s19, 2
    %p37 = por %p35, %p36
    %p38 = scmp.ne.s32.totalorder %s27, %s28
    %p39 = scmp.eq.s32.totalorder %s19, 0
    %p40 = por %p38, %p39
    %p41 = scmp.ne.s32.totalorder %s27, %s28
    %p42 = scmp.eq.s32.totalorder %s20, 2
    %p43 = por %p41, %p42
    %p45 = scmp.ne.s32.totalorder %s28, %s44
    %p46 = scmp.eq.s32.totalorder %s20, 0
    %p47 = por %p45, %p46
    %s48 = ssub.s32 %s14, %s21
    %p49 = scmp.eq.s32.totalorder %s48, 0
    %s51 = sadd.s32 %s50, 1
    %s52 = scalar_select %p49, %s50, %s51
    %p55 = pneg %p49
    %p56 = scmp.eq.s32.totalorder %s14, 2
    %p57 = por %p55, %p56
    %p58 = scmp.ne.s32.totalorder %s50, %s53
    %p59 = scmp.eq.s32.totalorder %s14, 0
    %p60 = por %p58, %p59
    %p61 = scmp.ne.s32.totalorder %s50, %s53
    %p62 = scmp.eq.s32.totalorder %s19, 2
    %p63 = por %p61, %p62
    %p64 = scmp.ne.s32.totalorder %s53, %s54
    %p65 = scmp.eq.s32.totalorder %s19, 0
    %p66 = por %p64, %p65
    %p67 = scmp.ne.s32.totalorder %s53, %s54
    %p68 = scmp.eq.s32.totalorder %s20, 2
    %p69 = por %p67, %p68
    %p71 = scmp.ne.s32.totalorder %s54, %s70
    %p72 = scmp.eq.s32.totalorder %s20, 0
    %p73 = por %p71, %p72
    %s75 = sadd.s32 %s74, 1
    %p78 = scmp.eq.s32.totalorder %s14, 2
    %p79 = scmp.ne.s32.totalorder %s74, %s76
    %p80 = scmp.eq.s32.totalorder %s14, 0
    %p81 = por %p79, %p80
    %p82 = scmp.ne.s32.totalorder %s74, %s76
    %p83 = scmp.eq.s32.totalorder %s19, 2
    %p84 = por %p82, %p83
    %p85 = scmp.ne.s32.totalorder %s76, %s77
    %p86 = scmp.eq.s32.totalorder %s19, 0
    %p87 = por %p85, %p86
    %p88 = scmp.ne.s32.totalorder %s76, %s77
    %p89 = scmp.eq.s32.totalorder %s20, 2
    %p90 = por %p88, %p89
    %p92 = scmp.ne.s32.totalorder %s77, %s91
    %p93 = scmp.eq.s32.totalorder %s20, 0
    %p94 = por %p92, %p93
    %s96 = sadd.s32 %s95, 1
    %p99 = scmp.eq.s32.totalorder %s14, 2
    %p100 = scmp.ne.s32.totalorder %s95, %s97
    %p101 = scmp.eq.s32.totalorder %s14, 0
    %p102 = por %p100, %p101
    %p103 = scmp.ne.s32.totalorder %s95, %s97
    %p104 = scmp.eq.s32.totalorder %s19, 2
    %p105 = por %p103, %p104
    %p106 = scmp.ne.s32.totalorder %s97, %s98
    %p107 = scmp.eq.s32.totalorder %s19, 0
    %p108 = por %p106, %p107
    %p109 = scmp.ne.s32.totalorder %s97, %s98
    %p110 = scmp.eq.s32.totalorder %s20, 2
    %p111 = por %p109, %p110
    %p113 = scmp.ne.s32.totalorder %s98, %s112
    %p114 = scmp.eq.s32.totalorder %s20, 0
    %p115 = por %p113, %p114
    %s117 = sadd.s32 %s116, 1
    %p120 = scmp.eq.s32.totalorder %s14, 2
    %p121 = scmp.ne.s32.totalorder %s116, %s118
    %p122 = scmp.eq.s32.totalorder %s14, 0
    %p123 = por %p121, %p122
    %p124 = scmp.ne.s32.totalorder %s116, %s118
    %p125 = scmp.eq.s32.totalorder %s19, 2
    %p126 = por %p124, %p125
    %p127 = scmp.ne.s32.totalorder %s118, %s119
    %p128 = scmp.eq.s32.totalorder %s19, 0
    %p129 = por %p127, %p128
    %p130 = scmp.ne.s32.totalorder %s118, %s119
    %p131 = scmp.eq.s32.totalorder %s20, 2
    %p132 = por %p130, %p131
    %p134 = scmp.ne.s32.totalorder %s119, %s133
    %p135 = scmp.eq.s32.totalorder %s20, 0
    %p136 = por %p134, %p135
    %s138 = sadd.s32 %s137, 1
    %p141 = scmp.eq.s32.totalorder %s14, 2
    %p142 = scmp.ne.s32.totalorder %s137, %s139
    %p143 = scmp.eq.s32.totalorder %s14, 0
    %p144 = por %p142, %p143
    %p145 = scmp.ne.s32.totalorder %s137, %s139
    %p146 = scmp.eq.s32.totalorder %s19, 2
    %p147 = por %p145, %p146
    %p148 = scmp.ne.s32.totalorder %s139, %s140
    %p149 = scmp.eq.s32.totalorder %s19, 0
    %p150 = por %p148, %p149
    %p151 = scmp.ne.s32.totalorder %s139, %s140
    %p152 = scmp.eq.s32.totalorder %s20, 2
    %p153 = por %p151, %p152
    %p155 = scmp.ne.s32.totalorder %s140, %s154
    %p156 = scmp.eq.s32.totalorder %s20, 0
    %p157 = por %p155, %p156
    %s159 = sadd.s32 %s158, 1
    %p162 = scmp.eq.s32.totalorder %s14, 2
    %p163 = scmp.ne.s32.totalorder %s158, %s160
    %p164 = scmp.eq.s32.totalorder %s14, 0
    %p165 = por %p163, %p164
    %p166 = scmp.ne.s32.totalorder %s158, %s160
    %p167 = scmp.eq.s32.totalorder %s19, 2
    %p168 = por %p166, %p167
    %p169 = scmp.ne.s32.totalorder %s160, %s161
    %p170 = scmp.eq.s32.totalorder %s19, 0
    %p171 = por %p169, %p170
    %p172 = scmp.ne.s32.totalorder %s160, %s161
    %p173 = scmp.eq.s32.totalorder %s20, 2
    %p174 = por %p172, %p173
    %p176 = scmp.ne.s32.totalorder %s161, %s175
    %p177 = scmp.eq.s32.totalorder %s20, 0
    %p178 = por %p176, %p177
    %s179 = ssub.s32 %s14, %s21
    %p180 = scmp.eq.s32.totalorder %s179, 0
    %s182 = sadd.s32 %s181, 1
    %s183 = scalar_select %p180, %s181, %s182
    %p186 = pneg %p180
    %p187 = scmp.eq.s32.totalorder %s14, 2
    %p188 = por %p186, %p187
    %p189 = scmp.ne.s32.totalorder %s181, %s184
    %p190 = scmp.eq.s32.totalorder %s14, 0
    %p191 = por %p189, %p190
    %p192 = scmp.ne.s32.totalorder %s181, %s184
    %p193 = scmp.eq.s32.totalorder %s19, 2
    %p194 = por %p192, %p193
    %p195 = scmp.ne.s32.totalorder %s184, %s185
    %p196 = scmp.eq.s32.totalorder %s19, 0
    %p197 = por %p195, %p196
    %p198 = scmp.ne.s32.totalorder %s184, %s185
    %p199 = scmp.eq.s32.totalorder %s20, 2
    %p200 = por %p198, %p199
    %p202 = scmp.ne.s32.totalorder %s185, %s201
    %p203 = scmp.eq.s32.totalorder %s20, 0
    %p204 = por %p202, %p203
    %p205 = scmp.le.s32.totalorder 1, %s14
    %p206 = scmp.lt.s32.totalorder %s14, 4
    %p207 = pnand %p205, %p206
    %p208 = pneg %p207
    // Predicated region
    $region9: #{edge_decoder_pallas.1} parent=5 // pred_check
      _
    $region10: #{edge_decoder_pallas.1} parent=5 // pred_check_branch
      %210 = sbr.rel (%p207) target = $region12
    $region11: #{edge_decoder_pallas.1} parent=5 // pred_region
      %s211 = ssub.s32 %s14, 1
      // Predicated region
      $region13: #{edge_decoder_pallas.1} parent=11 // pred_check
        %p212 = pneg %p87
      $region14: #{edge_decoder_pallas.1} parent=11 // pred_check_branch
        %214 = sbr.rel (%p212) target = $region16
      $region15: #{edge_decoder_pallas.1} parent=11 // pred_region
        _
      $region16: #{edge_decoder_pallas.1} parent=11 // pred_fallthru
        _
      // Predicated region
      $region17: #{edge_decoder_pallas.1} parent=11 // pred_check
        %p215 = pneg %p108
      $region18: #{edge_decoder_pallas.1} parent=11 // pred_check_branch
        %217 = sbr.rel (%p215) target = $region20
      $region19: #{edge_decoder_pallas.1} parent=11 // pred_region
        _
      $region20: #{edge_decoder_pallas.1} parent=11 // pred_fallthru
        _
      // Predicated region
      $region21: #{edge_decoder_pallas.1} parent=11 // pred_check
        %p218 = pneg %p129
      $region22: #{edge_decoder_pallas.1} parent=11 // pred_check_branch
        %220 = sbr.rel (%p218) target = $region24
      $region23: #{edge_decoder_pallas.1} parent=11 // pred_region
        _
      $region24: #{edge_decoder_pallas.1} parent=11 // pred_fallthru
        _
      // Predicated region
      $region25: #{edge_decoder_pallas.1} parent=11 // pred_check
        %p221 = pneg %p150
      $region26: #{edge_decoder_pallas.1} parent=11 // pred_check_branch
        %223 = sbr.rel (%p221) target = $region28
      $region27: #{edge_decoder_pallas.1} parent=11 // pred_region
        _
      $region28: #{edge_decoder_pallas.1} parent=11 // pred_fallthru
        _
      // Predicated region
      $region29: #{edge_decoder_pallas.1} parent=11 // pred_check
        %p224 = pneg %p171
      $region30: #{edge_decoder_pallas.1} parent=11 // pred_check_branch
        %226 = sbr.rel (%p224) target = $region32
      $region31: #{edge_decoder_pallas.1} parent=11 // pred_region
        _
      $region32: #{edge_decoder_pallas.1} parent=11 // pred_fallthru
        _
    $region12: #{edge_decoder_pallas.1} parent=5 // pred_fallthru
      _
    %p227 = scmp.lt.s32.totalorder %s14, 3
    // Predicated region
    $region33: #{edge_decoder_pallas.1} parent=5 // pred_check
      %p228 = pneg %p227
    $region34: #{edge_decoder_pallas.1} parent=5 // pred_check_branch
      %230 = sbr.rel (%p228) target = $region36
    $region35: #{edge_decoder_pallas.1} parent=5 // pred_region
      // Predicated region
      $region37: #{edge_decoder_pallas.1} parent=35 // pred_check
        %p231 = pneg %p34
      $region38: #{edge_decoder_pallas.1} parent=35 // pred_check_branch
        %233 = sbr.rel (%p231) target = $region40
      $region39: #{edge_decoder_pallas.1} parent=35 // pred_region
        %s234 = smul.u32 16, %s14
        %p235 = scmp.lt.s32.totalorder %s234, 47
        %s236 = scalar_select %p235, %s234, 47
        %s237 = smul.addr %s236, 8
        %s238 = scalar_lea.vmem %s0, %s237
        %s239 = smul.u32 16, %s14
      $region40: #{edge_decoder_pallas.1} parent=35 // pred_fallthru
        _
      // Predicated region
      $region41: #{edge_decoder_pallas.1} parent=35 // pred_check
        %p240 = pneg %p60
      $region42: #{edge_decoder_pallas.1} parent=35 // pred_check_branch
        %242 = sbr.rel (%p240) target = $region44
      $region43: #{edge_decoder_pallas.1} parent=35 // pred_region
        %s243 = smul.u32 16, %s14
        %p244 = scmp.lt.s32.totalorder %s243, 47
        %s245 = scalar_select %p244, %s243, 47
        %s246 = smul.addr %s245, 8
        %s247 = scalar_lea.vmem %s1, %s246
        %s248 = smul.u32 16, %s14
      $region44: #{edge_decoder_pallas.1} parent=35 // pred_fallthru
        _
    $region36: #{edge_decoder_pallas.1} parent=5 // pred_fallthru
      _
    %p249 = scmp.le.s32.totalorder 1, %s14
    %p250 = scmp.lt.s32.totalorder %s14, 4
    %p251 = pnand %p249, %p250
    %p252 = pneg %p251
    // Predicated region
    $region45: #{edge_decoder_pallas.1} parent=5 // pred_check
      _
    $region46: #{edge_decoder_pallas.1} parent=5 // pred_check_branch
      %254 = sbr.rel (%p251) target = $region48
    $region47: #{edge_decoder_pallas.1} parent=5 // pred_region
      %s255 = ssub.s32 %s14, 1
      %s256 = smul.u32 16, %s19
      %p257 = scmp.lt.s32.totalorder %s256, 47
      %s258 = scalar_select %p257, %s256, 47
      %s259 = smul.addr %s258, 8
      %s260 = scalar_lea.vmem %s0, %s259
      %p261 = pneg %p40
      %p262 = pneg %p37
      %s263 = smul.u32 16, %s19
      %p264 = scmp.lt.s32.totalorder %s263, 47
      %s265 = scalar_select %p264, %s263, 47
      %s266 = smul.addr %s265, 8
      %s267 = scalar_lea.vmem %s1, %s266
      %p268 = pneg %p66
      %p269 = pneg %p63
      %p270 = pneg %p87
      %p271 = pneg %p84
      %p272 = pneg %p108
      %p273 = pneg %p105
      %p274 = pneg %p129
      %p275 = pneg %p126
      %p276 = pneg %p150
      %p277 = pneg %p147
      %p278 = pneg %p171
      %p279 = pneg %p168
      %p280 = pneg %p197
      %p281 = pneg %p194
      %p282 = scmp.lt.s32.totalorder %s19, 2
      %s283 = scalar_select %p282, %s19, 2
      %s284 = scalar_lea.vmem %s7, %s283
      %s285 = smul.u32 16, %s19
      %p286 = scmp.lt.s32.totalorder %s285, 47
      %s287 = scalar_select %p286, %s285, 47
      %s288 = smul.addr %s287, 8
      %s289 = scalar_lea.vmem %s0, %s288
      %s290 = smul.u32 16, %s19
      %s291 = smul.u32 16, %s19
      %p292 = scmp.lt.s32.totalorder %s291, 47
      %s293 = scalar_select %p292, %s291, 47
      %s294 = smul.addr %s293, 8
      %s295 = scalar_lea.vmem %s1, %s294
      %s296 = smul.u32 16, %s19
      %p297 = scmp.lt.s32.totalorder %s19, 2
      %s298 = scalar_select %p297, %s19, 2
      %s299 = scalar_lea.vmem %s7, %s298
      %v300 = vld [vmem:[%s289] sm:$0xff]
      %v301 = vld [vmem:[%s289 + $0x8] sm:$0xff]
      %v302 = vld [vmem:[%s289 + $0x10] sm:$0xff]
      %v303 = vld [vmem:[%s289 + $0x18] sm:$0xff]
      %v304 = vld [vmem:[%s289 + $0x20] sm:$0xff]
      %v305 = vld [vmem:[%s289 + $0x28] sm:$0xff]
      %v306 = vld [vmem:[%s289 + $0x30] sm:$0xff]
      %v307 = vld [vmem:[%s289 + $0x38] sm:$0xff]
      %v308 = vld [vmem:[%s289 + $0x40] sm:$0xff]
      %v309 = vld [vmem:[%s289 + $0x48] sm:$0xff]
      %v310 = vld [vmem:[%s289 + $0x50] sm:$0xff]
      %v311 = vld [vmem:[%s289 + $0x58] sm:$0xff]
      %v312 = vld [vmem:[%s289 + $0x60] sm:$0xff]
      %v313 = vld [vmem:[%s289 + $0x68] sm:$0xff]
      %v314 = vld [vmem:[%s289 + $0x70] sm:$0xff]
      %v315 = vld [vmem:[%s289 + $0x78] sm:$0xff]
      %v316 = vld [vmem:[%s295] sm:$0xff]
      %v317 = vld [vmem:[%s295 + $0x8] sm:$0xff]
      %v318 = vld [vmem:[%s295 + $0x10] sm:$0xff]
      %v319 = vld [vmem:[%s295 + $0x18] sm:$0xff]
      %v320 = vld [vmem:[%s295 + $0x20] sm:$0xff]
      %v321 = vld [vmem:[%s295 + $0x28] sm:$0xff]
      %v322 = vld [vmem:[%s295 + $0x30] sm:$0xff]
      %v323 = vld [vmem:[%s295 + $0x38] sm:$0xff]
      %v324 = vld [vmem:[%s295 + $0x40] sm:$0xff]
      %v325 = vld [vmem:[%s295 + $0x48] sm:$0xff]
      %v326 = vld [vmem:[%s295 + $0x50] sm:$0xff]
      %v327 = vld [vmem:[%s295 + $0x58] sm:$0xff]
      %v328 = vld [vmem:[%s295 + $0x60] sm:$0xff]
      %v329 = vld [vmem:[%s295 + $0x68] sm:$0xff]
      %v330 = vld [vmem:[%s295 + $0x70] sm:$0xff]
      %v331 = vld [vmem:[%s295 + $0x78] sm:$0xff]
      %v332 = vld [vmem:[%s2] sm:$0xff]
      %v333 = vld [vmem:[%s2 + $0x8] sm:$0xff]
      %v334 = vld [vmem:[%s2 + $0x10] sm:$0xff]
      %v335 = vld [vmem:[%s2 + $0x18] sm:$0xff]
      %v336 = vld [vmem:[%s3] sm:$0xff]
      %v337 = vld [vmem:[%s3 + $0x8] sm:$0xff]
      %v338 = vld [vmem:[%s3 + $0x10] sm:$0xff]
      %v339 = vld [vmem:[%s3 + $0x18] sm:$0xff]
      %vm340 = vcmask 261120
      %v342 = vsel %vm340, %v316, 0
      %v345 = vsel %vm340, %v317, 0
      %v348 = vsel %vm340, %v318, 0
      %v351 = vsel %vm340, %v319, 0
      %v354 = vsel %vm340, %v320, 0
      %v357 = vsel %vm340, %v321, 0
      %v360 = vsel %vm340, %v322, 0
      %v363 = vsel %vm340, %v323, 0
      %v366 = vsel %vm340, %v324, 0
      %v369 = vsel %vm340, %v325, 0
      %v372 = vsel %vm340, %v326, 0
      %v375 = vsel %vm340, %v327, 0
      %v378 = vsel %vm340, %v328, 0
      %v381 = vsel %vm340, %v329, 0
      %v384 = vsel %vm340, %v330, 0
      %v387 = vsel %vm340, %v331, 0
      %389 = vmatprep.subr.mxu0 0.0
      %390 = vmatpush1.msra.mxu0 %v336
      %391 = vmatprep.subr.mxu0 0.0
      %392 = vmatpush1.msra.mxu0 %v337
      %393 = vmatprep.subr.mxu0 0.0
      %394 = vmatpush1.msra.mxu0 %v338
      %395 = vmatprep.subr.mxu0 0.0
      %396 = vmatpush1.msra.mxu0 %v339
      %397 = vmatprep.subr.mxu0 0.0
      %398 = vmatpush1.msra.mxu0 0.0
      %399 = vmatprep.subr.mxu0 0.0
      %400 = vmatpush1.msra.mxu0 0.0
      %401 = vmatprep.subr.mxu0 0.0
      %402 = vmatpush1.msra.mxu0 0.0
      %403 = vmatprep.subr.mxu0 0.0
      %404 = vmatpush1.msra.mxu0 0.0
      %405 = vmatprep.subr.mxu0 0.0
      %406 = vmatpush1.msra.mxu0 0.0
      %407 = vmatprep.subr.mxu0 0.0
      %408 = vmatpush1.msra.mxu0 0.0
      %409 = vmatprep.subr.mxu0 0.0
      %410 = vmatpush1.msra.mxu0 0.0
      %411 = vmatprep.subr.mxu0 0.0
      %412 = vmatpush1.msra.mxu0 0.0
      %413 = vmatprep.subr.mxu0 0.0
      %414 = vmatpush1.msra.mxu0 0.0
      %415 = vmatprep.subr.mxu0 0.0
      %416 = vmatpush1.msra.mxu0 0.0
      %417 = vmatprep.subr.mxu0 0.0
      %418 = vmatpush1.msra.mxu0 0.0
      %419 = vmatprep.subr.mxu0 0.0
      %420 = vmatpush1.msra.mxu0 0.0
      %421 = vmatprep.subr.mxu0 0.0
      %422 = vmatpush1.msra.mxu0 0.0
      %423 = vmatprep.subr.mxu0 0.0
      %424 = vmatpush1.msra.mxu0 0.0
      %425 = vmatprep.subr.mxu0 0.0
      %426 = vmatpush1.msra.mxu0 0.0
      %427 = vmatprep.subr.mxu0 0.0
      %428 = vmatpush1.msra.mxu0 0.0
      %429 = vmatprep.subr.mxu0 0.0
      %430 = vmatpush1.msra.mxu0 0.0
      %431 = vmatprep.subr.mxu0 0.0
      %432 = vmatpush1.msra.mxu0 0.0
      %433 = vmatprep.subr.mxu0 0.0
      %434 = vmatpush1.msra.mxu0 0.0
      %435 = vmatprep.subr.mxu0 0.0
      %436 = vmatpush1.msra.mxu0 0.0
      %437 = vmatprep.subr.mxu0 0.0
      %438 = vmatpush1.msra.mxu0 0.0
      %439 = vmatprep.subr.mxu0 0.0
      %440 = vmatpush1.msra.mxu0 0.0
      %441 = vmatprep.subr.mxu0 0.0
      %442 = vmatpush1.msra.mxu0 0.0
      %443 = vmatprep.subr.mxu0 0.0
      %444 = vmatpush1.msra.mxu0 0.0
      %445 = vmatprep.subr.mxu0 0.0
      %446 = vmatpush1.msra.mxu0 0.0
      %447 = vmatprep.subr.mxu0 0.0
      %448 = vmatpush1.msra.mxu0 0.0
      %449 = vmatprep.subr.mxu0 0.0
      %450 = vmatpush1.msra.mxu0 0.0
      %451 = vmatprep.subr.mxu0 0.0
      %452 = vmatpush1.msra.mxu0 0.0
      %453 = vmatprep.mubr.f32.mxu0 0.0
      %454 = vmatmul.mubr.f32.gmra.mrb[0].mxu0 %v342
      %v455 = vpop.f32.mrb[0].mxu0
      %v456 = vadd.f32 0.0, %v455
      %v457 = vpop.f32.mrb[0].mxu0
      %458 = vmatprep.mubr.f32.mxu0 0.0
      %459 = vmatmul.mubr.f32.gmra.mrb[0].mxu0 %v345
      %v460 = vpop.f32.mrb[0].mxu0
      %v461 = vadd.f32 0.0, %v460
      %v462 = vpop.f32.mrb[0].mxu0
      %463 = vmatprep.mubr.f32.mxu0 0.0
      %464 = vmatmul.mubr.f32.gmra.mrb[0].mxu0 %v348
      %v465 = vpop.f32.mrb[0].mxu0
      %v466 = vadd.f32 0.0, %v465
      %v467 = vpop.f32.mrb[0].mxu0
      %468 = vmatprep.mubr.f32.mxu0 0.0
      %469 = vmatmul.mubr.f32.gmra.mrb[0].mxu0 %v351
      %v470 = vpop.f32.mrb[0].mxu0
      %v471 = vadd.f32 0.0, %v470
      %v472 = vpop.f32.mrb[0].mxu0
      %473 = vmatprep.mubr.f32.mxu0 0.0
      %474 = vmatmul.mubr.f32.gmra.mrb[0].mxu0 %v354
      %v475 = vpop.f32.mrb[0].mxu0
      %v476 = vadd.f32 0.0, %v475
      %v477 = vpop.f32.mrb[0].mxu0
      %478 = vmatprep.mubr.f32.mxu0 0.0
      %479 = vmatmul.mubr.f32.gmra.mrb[0].mxu0 %v357
      %v480 = vpop.f32.mrb[0].mxu0
      %v481 = vadd.f32 0.0, %v480
      %v482 = vpop.f32.mrb[0].mxu0
      %483 = vmatprep.mubr.f32.mxu0 0.0
      %484 = vmatmul.mubr.f32.gmra.mrb[0].mxu0 %v360
      %v485 = vpop.f32.mrb[0].mxu0
      %v486 = vadd.f32 0.0, %v485
      %v487 = vpop.f32.mrb[0].mxu0
      %488 = vmatprep.mubr.f32.mxu0 0.0
      %489 = vmatmul.mubr.f32.gmra.mrb[0].mxu0 %v363
      %v490 = vpop.f32.mrb[0].mxu0
      %v491 = vadd.f32 0.0, %v490
      %v492 = vpop.f32.mrb[0].mxu0
      %493 = vmatprep.mubr.f32.mxu0 0.0
      %494 = vmatmul.mubr.f32.gmra.mrb[0].mxu0 %v366
      %v495 = vpop.f32.mrb[0].mxu0
      %v496 = vadd.f32 0.0, %v495
      %v497 = vpop.f32.mrb[0].mxu0
      %498 = vmatprep.mubr.f32.mxu0 0.0
      %499 = vmatmul.mubr.f32.gmra.mrb[0].mxu0 %v369
      %v500 = vpop.f32.mrb[0].mxu0
      %v501 = vadd.f32 0.0, %v500
      %v502 = vpop.f32.mrb[0].mxu0
      %503 = vmatprep.mubr.f32.mxu0 0.0
      %504 = vmatmul.mubr.f32.gmra.mrb[0].mxu0 %v372
      %v505 = vpop.f32.mrb[0].mxu0
      %v506 = vadd.f32 0.0, %v505
      %v507 = vpop.f32.mrb[0].mxu0
      %508 = vmatprep.mubr.f32.mxu0 0.0
      %509 = vmatmul.mubr.f32.gmra.mrb[0].mxu0 %v375
      %v510 = vpop.f32.mrb[0].mxu0
      %v511 = vadd.f32 0.0, %v510
      %v512 = vpop.f32.mrb[0].mxu0
      %513 = vmatprep.mubr.f32.mxu0 0.0
      %514 = vmatmul.mubr.f32.gmra.mrb[0].mxu0 %v378
      %v515 = vpop.f32.mrb[0].mxu0
      %v516 = vadd.f32 0.0, %v515
      %v517 = vpop.f32.mrb[0].mxu0
      %518 = vmatprep.mubr.f32.mxu0 0.0
      %519 = vmatmul.mubr.f32.gmra.mrb[0].mxu0 %v381
      %v520 = vpop.f32.mrb[0].mxu0
      %v521 = vadd.f32 0.0, %v520
      %v522 = vpop.f32.mrb[0].mxu0
      %523 = vmatprep.mubr.f32.mxu0 0.0
      %524 = vmatmul.mubr.f32.gmra.mrb[0].mxu0 %v384
      %v525 = vpop.f32.mrb[0].mxu0
      %v526 = vadd.f32 0.0, %v525
      %v527 = vpop.f32.mrb[0].mxu0
      %528 = vmatprep.mubr.f32.mxu0 0.0
      %529 = vmatmul.mubr.f32.gmra.mrb[0].mxu0 %v387
      %v530 = vpop.f32.mrb[0].mxu0
      %v531 = vadd.f32 0.0, %v530
      %v532 = vpop.f32.mrb[0].mxu0
      %533 = vdwg.mxu0
      %v535 = vsel %vm340, %v300, 0
      %v538 = vsel %vm340, %v301, 0
      %v541 = vsel %vm340, %v302, 0
      %v544 = vsel %vm340, %v303, 0
      %v547 = vsel %vm340, %v304, 0
      %v550 = vsel %vm340, %v305, 0
      %v553 = vsel %vm340, %v306, 0
      %v556 = vsel %vm340, %v307, 0
      %v559 = vsel %vm340, %v308, 0
      %v562 = vsel %vm340, %v309, 0
      %v565 = vsel %vm340, %v310, 0
      %v568 = vsel %vm340, %v311, 0
      %v571 = vsel %vm340, %v312, 0
      %v574 = vsel %vm340, %v313, 0
      %v577 = vsel %vm340, %v314, 0
      %v580 = vsel %vm340, %v315, 0
      %582 = vmatprep.subr.mxu0 0.0
      %583 = vmatpush1.msra.mxu0 %v332
      %584 = vmatprep.subr.mxu0 0.0
      %585 = vmatpush1.msra.mxu0 %v333
      %586 = vmatprep.subr.mxu0 0.0
      %587 = vmatpush1.msra.mxu0 %v334
      %588 = vmatprep.subr.mxu0 0.0
      %589 = vmatpush1.msra.mxu0 %v335
      %590 = vmatprep.subr.mxu0 0.0
      %591 = vmatpush1.msra.mxu0 0.0
      %592 = vmatprep.subr.mxu0 0.0
      %593 = vmatpush1.msra.mxu0 0.0
      %594 = vmatprep.subr.mxu0 0.0
      %595 = vmatpush1.msra.mxu0 0.0
      %596 = vmatprep.subr.mxu0 0.0
      %597 = vmatpush1.msra.mxu0 0.0
      %598 = vmatprep.subr.mxu0 0.0
      %599 = vmatpush1.msra.mxu0 0.0
      %600 = vmatprep.subr.mxu0 0.0
      %601 = vmatpush1.msra.mxu0 0.0
      %602 = vmatprep.subr.mxu0 0.0
      %603 = vmatpush1.msra.mxu0 0.0
      %604 = vmatprep.subr.mxu0 0.0
      %605 = vmatpush1.msra.mxu0 0.0
      %606 = vmatprep.subr.mxu0 0.0
      %607 = vmatpush1.msra.mxu0 0.0
      %608 = vmatprep.subr.mxu0 0.0
      %609 = vmatpush1.msra.mxu0 0.0
      %610 = vmatprep.subr.mxu0 0.0
      %611 = vmatpush1.msra.mxu0 0.0
      %612 = vmatprep.subr.mxu0 0.0
      %613 = vmatpush1.msra.mxu0 0.0
      %614 = vmatprep.subr.mxu0 0.0
      %615 = vmatpush1.msra.mxu0 0.0
      %616 = vmatprep.subr.mxu0 0.0
      %617 = vmatpush1.msra.mxu0 0.0
      %618 = vmatprep.subr.mxu0 0.0
      %619 = vmatpush1.msra.mxu0 0.0
      %620 = vmatprep.subr.mxu0 0.0
      %621 = vmatpush1.msra.mxu0 0.0
      %622 = vmatprep.subr.mxu0 0.0
      %623 = vmatpush1.msra.mxu0 0.0
      %624 = vmatprep.subr.mxu0 0.0
      %625 = vmatpush1.msra.mxu0 0.0
      %626 = vmatprep.subr.mxu0 0.0
      %627 = vmatpush1.msra.mxu0 0.0
      %628 = vmatprep.subr.mxu0 0.0
      %629 = vmatpush1.msra.mxu0 0.0
      %630 = vmatprep.subr.mxu0 0.0
      %631 = vmatpush1.msra.mxu0 0.0
      %632 = vmatprep.subr.mxu0 0.0
      %633 = vmatpush1.msra.mxu0 0.0
      %634 = vmatprep.subr.mxu0 0.0
      %635 = vmatpush1.msra.mxu0 0.0
      %636 = vmatprep.subr.mxu0 0.0
      %637 = vmatpush1.msra.mxu0 0.0
      %638 = vmatprep.subr.mxu0 0.0
      %639 = vmatpush1.msra.mxu0 0.0
      %640 = vmatprep.subr.mxu0 0.0
      %641 = vmatpush1.msra.mxu0 0.0
      %642 = vmatprep.subr.mxu0 0.0
      %643 = vmatpush1.msra.mxu0 0.0
      %644 = vmatprep.subr.mxu0 0.0
      %645 = vmatpush1.msra.mxu0 0.0
      %646 = vmatprep.mubr.f32.mxu0 0.0
      %647 = vmatmul.mubr.f32.gmra.mrb[0].mxu0 %v535
      %v648 = vpop.f32.mrb[0].mxu0
      %v649 = vadd.f32 %v456, %v648
      %v650 = vpop.f32.mrb[0].mxu0
      %651 = vmatprep.mubr.f32.mxu0 0.0
      %652 = vmatmul.mubr.f32.gmra.mrb[0].mxu0 %v538
      %v653 = vpop.f32.mrb[0].mxu0
      %v654 = vadd.f32 %v461, %v653
      %v655 = vpop.f32.mrb[0].mxu0
      %656 = vmatprep.mubr.f32.mxu0 0.0
      %657 = vmatmul.mubr.f32.gmra.mrb[0].mxu0 %v541
      %v658 = vpop.f32.mrb[0].mxu0
      %v659 = vadd.f32 %v466, %v658
      %v660 = vpop.f32.mrb[0].mxu0
      %661 = vmatprep.mubr.f32.mxu0 0.0
      %662 = vmatmul.mubr.f32.gmra.mrb[0].mxu0 %v544
      %v663 = vpop.f32.mrb[0].mxu0
      %v664 = vadd.f32 %v471, %v663
      %v665 = vpop.f32.mrb[0].mxu0
      %666 = vmatprep.mubr.f32.mxu0 0.0
      %667 = vmatmul.mubr.f32.gmra.mrb[0].mxu0 %v547
      %v668 = vpop.f32.mrb[0].mxu0
      %v669 = vadd.f32 %v476, %v668
      %v670 = vpop.f32.mrb[0].mxu0
      %671 = vmatprep.mubr.f32.mxu0 0.0
      %672 = vmatmul.mubr.f32.gmra.mrb[0].mxu0 %v550
      %v673 = vpop.f32.mrb[0].mxu0
      %v674 = vadd.f32 %v481, %v673
      %v675 = vpop.f32.mrb[0].mxu0
      %676 = vmatprep.mubr.f32.mxu0 0.0
      %677 = vmatmul.mubr.f32.gmra.mrb[0].mxu0 %v553
      %v678 = vpop.f32.mrb[0].mxu0
      %v679 = vadd.f32 %v486, %v678
      %v680 = vpop.f32.mrb[0].mxu0
      %681 = vmatprep.mubr.f32.mxu0 0.0
      %682 = vmatmul.mubr.f32.gmra.mrb[0].mxu0 %v556
      %v683 = vpop.f32.mrb[0].mxu0
      %v684 = vadd.f32 %v491, %v683
      %v685 = vpop.f32.mrb[0].mxu0
      %686 = vmatprep.mubr.f32.mxu0 0.0
      %687 = vmatmul.mubr.f32.gmra.mrb[0].mxu0 %v559
      %v688 = vpop.f32.mrb[0].mxu0
      %v689 = vadd.f32 %v496, %v688
      %v690 = vpop.f32.mrb[0].mxu0
      %691 = vmatprep.mubr.f32.mxu0 0.0
      %692 = vmatmul.mubr.f32.gmra.mrb[0].mxu0 %v562
      %v693 = vpop.f32.mrb[0].mxu0
      %v694 = vadd.f32 %v501, %v693
      %v695 = vpop.f32.mrb[0].mxu0
      %696 = vmatprep.mubr.f32.mxu0 0.0
      %697 = vmatmul.mubr.f32.gmra.mrb[0].mxu0 %v565
      %v698 = vpop.f32.mrb[0].mxu0
      %v699 = vadd.f32 %v506, %v698
      %v700 = vpop.f32.mrb[0].mxu0
      %701 = vmatprep.mubr.f32.mxu0 0.0
      %702 = vmatmul.mubr.f32.gmra.mrb[0].mxu0 %v568
      %v703 = vpop.f32.mrb[0].mxu0
      %v704 = vadd.f32 %v511, %v703
      %v705 = vpop.f32.mrb[0].mxu0
      %706 = vmatprep.mubr.f32.mxu0 0.0
      %707 = vmatmul.mubr.f32.gmra.mrb[0].mxu0 %v571
      %v708 = vpop.f32.mrb[0].mxu0
      %v709 = vadd.f32 %v516, %v708
      %v710 = vpop.f32.mrb[0].mxu0
      %711 = vmatprep.mubr.f32.mxu0 0.0
      %712 = vmatmul.mubr.f32.gmra.mrb[0].mxu0 %v574
      %v713 = vpop.f32.mrb[0].mxu0
      %v714 = vadd.f32 %v521, %v713
      %v715 = vpop.f32.mrb[0].mxu0
      %716 = vmatprep.mubr.f32.mxu0 0.0
      %717 = vmatmul.mubr.f32.gmra.mrb[0].mxu0 %v577
      %v718 = vpop.f32.mrb[0].mxu0
      %v719 = vadd.f32 %v526, %v718
      %v720 = vpop.f32.mrb[0].mxu0
      %721 = vmatprep.mubr.f32.mxu0 0.0
      %722 = vmatmul.mubr.f32.gmra.mrb[0].mxu0 %v580
      %v723 = vpop.f32.mrb[0].mxu0
      %v724 = vadd.f32 %v531, %v723
      %v725 = vpop.f32.mrb[0].mxu0
      %726 = vdwg.mxu0
      %v727 = vld [vmem:[%s4] sm:$0x1]
      %v729 = vlaneseq
      %v730 = vshrl.u32 %v729, 7
      %v731 = vsub.s32 0, %v730
      %v732 = vrot.slane %v727, %v731
      %v734 = vadd.f32 %v649, %v732
      %v735 = vadd.f32 %v654, %v732
      %v736 = vadd.f32 %v659, %v732
      %v737 = vadd.f32 %v664, %v732
      %v738 = vadd.f32 %v669, %v732
      %v739 = vadd.f32 %v674, %v732
      %v740 = vadd.f32 %v679, %v732
      %v741 = vadd.f32 %v684, %v732
      %v742 = vadd.f32 %v689, %v732
      %v743 = vadd.f32 %v694, %v732
      %v744 = vadd.f32 %v699, %v732
      %v745 = vadd.f32 %v704, %v732
      %v746 = vadd.f32 %v709, %v732
      %v747 = vadd.f32 %v714, %v732
      %v748 = vadd.f32 %v719, %v732
      %v749 = vadd.f32 %v724, %v732
      %v750 = vmax.f32 %v734, 0.0
      %v751 = vmax.f32 %v735, 0.0
      %v752 = vmax.f32 %v736, 0.0
      %v753 = vmax.f32 %v737, 0.0
      %v754 = vmax.f32 %v738, 0.0
      %v755 = vmax.f32 %v739, 0.0
      %v756 = vmax.f32 %v740, 0.0
      %v757 = vmax.f32 %v741, 0.0
      %v758 = vmax.f32 %v742, 0.0
      %v759 = vmax.f32 %v743, 0.0
      %v760 = vmax.f32 %v744, 0.0
      %v761 = vmax.f32 %v745, 0.0
      %v762 = vmax.f32 %v746, 0.0
      %v763 = vmax.f32 %v747, 0.0
      %v764 = vmax.f32 %v748, 0.0
      %v765 = vmax.f32 %v749, 0.0
      %v766 = vld [vmem:[%s5] sm:$0x1]
      %v768 = vlaneseq
      %v769 = vshrl.u32 %v768, 7
      %v770 = vsub.s32 0, %v769
      %v771 = vrot.slane %v766, %v770
      %v773 = vmul.f32 %v750, %v771
      %v774 = vmul.f32 %v751, %v771
      %v775 = vmul.f32 %v752, %v771
      %v776 = vmul.f32 %v753, %v771
      %v777 = vmul.f32 %v754, %v771
      %v778 = vmul.f32 %v755, %v771
      %v779 = vmul.f32 %v756, %v771
      %v780 = vmul.f32 %v757, %v771
      %v781 = vmul.f32 %v758, %v771
      %v782 = vmul.f32 %v759, %v771
      %v783 = vmul.f32 %v760, %v771
      %v784 = vmul.f32 %v761, %v771
      %v785 = vmul.f32 %v762, %v771
      %v786 = vmul.f32 %v763, %v771
      %v787 = vmul.f32 %v764, %v771
      %v788 = vmul.f32 %v765, %v771
      %v789 = vsel %vm340, %v773, 0.0
      %790 = vadd.xlane.f32.xlu0 %v789
      %v791 = vpop.xlane.xlu0 %790
      %v792 = vsel %vm340, %v774, 0.0
      %793 = vadd.xlane.f32.xlu0 %v792
      %v794 = vpop.xlane.xlu0 %793
      %v795 = vsel %vm340, %v775, 0.0
      %796 = vadd.xlane.f32.xlu0 %v795
      %v797 = vpop.xlane.xlu0 %796
      %v798 = vsel %vm340, %v776, 0.0
      %799 = vadd.xlane.f32.xlu0 %v798
      %v800 = vpop.xlane.xlu0 %799
      %v801 = vsel %vm340, %v777, 0.0
      %802 = vadd.xlane.f32.xlu0 %v801
      %v803 = vpop.xlane.xlu0 %802
      %v804 = vsel %vm340, %v778, 0.0
      %805 = vadd.xlane.f32.xlu0 %v804
      %v806 = vpop.xlane.xlu0 %805
      %v807 = vsel %vm340, %v779, 0.0
      %808 = vadd.xlane.f32.xlu0 %v807
      %v809 = vpop.xlane.xlu0 %808
      %v810 = vsel %vm340, %v780, 0.0
      %811 = vadd.xlane.f32.xlu0 %v810
      %v812 = vpop.xlane.xlu0 %811
      %v813 = vsel %vm340, %v781, 0.0
      %814 = vadd.xlane.f32.xlu0 %v813
      %v815 = vpop.xlane.xlu0 %814
      %v816 = vsel %vm340, %v782, 0.0
      %817 = vadd.xlane.f32.xlu0 %v816
      %v818 = vpop.xlane.xlu0 %817
      %v819 = vsel %vm340, %v783, 0.0
      %820 = vadd.xlane.f32.xlu0 %v819
      %v821 = vpop.xlane.xlu0 %820
      %v822 = vsel %vm340, %v784, 0.0
      %823 = vadd.xlane.f32.xlu0 %v822
      %v824 = vpop.xlane.xlu0 %823
      %v825 = vsel %vm340, %v785, 0.0
      %826 = vadd.xlane.f32.xlu0 %v825
      %v827 = vpop.xlane.xlu0 %826
      %v828 = vsel %vm340, %v786, 0.0
      %829 = vadd.xlane.f32.xlu0 %v828
      %v830 = vpop.xlane.xlu0 %829
      %v831 = vsel %vm340, %v787, 0.0
      %832 = vadd.xlane.f32.xlu0 %v831
      %v833 = vpop.xlane.xlu0 %832
      %v834 = vsel %vm340, %v788, 0.0
      %835 = vadd.xlane.f32.xlu0 %v834
      %v836 = vpop.xlane.xlu0 %835
      %s837 = sld [smem:[#allocation2]]
      %v838 = vstv %s837
      %v839 = vadd.f32 %v791, %v838
      %v840 = vadd.f32 %v794, %v838
      %v841 = vadd.f32 %v797, %v838
      %v842 = vadd.f32 %v800, %v838
      %v843 = vadd.f32 %v803, %v838
      %v844 = vadd.f32 %v806, %v838
      %v845 = vadd.f32 %v809, %v838
      %v846 = vadd.f32 %v812, %v838
      %v847 = vadd.f32 %v815, %v838
      %v848 = vadd.f32 %v818, %v838
      %v849 = vadd.f32 %v821, %v838
      %v850 = vadd.f32 %v824, %v838
      %v851 = vadd.f32 %v827, %v838
      %v852 = vadd.f32 %v830, %v838
      %v853 = vadd.f32 %v833, %v838
      %v854 = vadd.f32 %v836, %v838
      %v871 = vlaneseq
      %v872 = vand.u32 %v871, 127
      %v873 = vlaneseq
      %v874 = vshrl.u32 %v873, 7
      %v875 = vsub.s32 %v872, %v874
      %v876 = vrot.slane %v839, %v875
      %v877 = vadd.s32 %v872, 4294967288
      %v878 = vlaneseq
      %v879 = vshrl.u32 %v878, 7
      %v880 = vsub.s32 %v877, %v879
      %v881 = vrot.slane %v840, %v880
      %vm882 = vcmask 130112
      %v883 = vsel %vm882, %v881, %v876
      %v884 = vadd.s32 %v872, 4294967280
      %v885 = vlaneseq
      %v886 = vshrl.u32 %v885, 7
      %v887 = vsub.s32 %v884, %v886
      %v888 = vrot.slane %v841, %v887
      %vm889 = vcmask 195712
      %v890 = vsel %vm889, %v888, %v883
      %v891 = vadd.s32 %v872, 4294967272
      %v892 = vlaneseq
      %v893 = vshrl.u32 %v892, 7
      %v894 = vsub.s32 %v891, %v893
      %v895 = vrot.slane %v842, %v894
      %vm896 = vcmask 261312
      %v897 = vsel %vm896, %v895, %v890
      %v898 = vadd.s32 %v872, 4294967264
      %v899 = vlaneseq
      %v900 = vshrl.u32 %v899, 7
      %v901 = vsub.s32 %v898, %v900
      %v902 = vrot.slane %v843, %v901
      %vm903 = vcmask 326912
      %v904 = vsel %vm903, %v902, %v897
      %v905 = vadd.s32 %v872, 4294967256
      %v906 = vlaneseq
      %v907 = vshrl.u32 %v906, 7
      %v908 = vsub.s32 %v905, %v907
      %v909 = vrot.slane %v844, %v908
      %vm910 = vcmask 392512
      %v911 = vsel %vm910, %v909, %v904
      %v912 = vadd.s32 %v872, 4294967248
      %v913 = vlaneseq
      %v914 = vshrl.u32 %v913, 7
      %v915 = vsub.s32 %v912, %v914
      %v916 = vrot.slane %v845, %v915
      %vm917 = vcmask 458112
      %v918 = vsel %vm917, %v916, %v911
      %v919 = vadd.s32 %v872, 4294967240
      %v920 = vlaneseq
      %v921 = vshrl.u32 %v920, 7
      %v922 = vsub.s32 %v919, %v921
      %v923 = vrot.slane %v846, %v922
      %vm924 = vcmask 523712
      %v925 = vsel %vm924, %v923, %v918
      %v926 = vadd.s32 %v872, 4294967232
      %v927 = vlaneseq
      %v928 = vshrl.u32 %v927, 7
      %v929 = vsub.s32 %v926, %v928
      %v930 = vrot.slane %v847, %v929
      %vm931 = vcmask 589312
      %v932 = vsel %vm931, %v930, %v925
      %v933 = vadd.s32 %v872, 4294967224
      %v934 = vlaneseq
      %v935 = vshrl.u32 %v934, 7
      %v936 = vsub.s32 %v933, %v935
      %v937 = vrot.slane %v848, %v936
      %vm938 = vcmask 654912
      %v939 = vsel %vm938, %v937, %v932
      %v940 = vadd.s32 %v872, 4294967216
      %v941 = vlaneseq
      %v942 = vshrl.u32 %v941, 7
      %v943 = vsub.s32 %v940, %v942
      %v944 = vrot.slane %v849, %v943
      %vm945 = vcmask 720512
      %v946 = vsel %vm945, %v944, %v939
      %v947 = vadd.s32 %v872, 4294967208
      %v948 = vlaneseq
      %v949 = vshrl.u32 %v948, 7
      %v950 = vsub.s32 %v947, %v949
      %v951 = vrot.slane %v850, %v950
      %vm952 = vcmask 786112
      %v953 = vsel %vm952, %v951, %v946
      %v954 = vadd.s32 %v872, 4294967200
      %v955 = vlaneseq
      %v956 = vshrl.u32 %v955, 7
      %v957 = vsub.s32 %v954, %v956
      %v958 = vrot.slane %v851, %v957
      %vm959 = vcmask 851712
      %v960 = vsel %vm959, %v958, %v953
      %v961 = vadd.s32 %v872, 4294967192
      %v962 = vlaneseq
      %v963 = vshrl.u32 %v962, 7
      %v964 = vsub.s32 %v961, %v963
      %v965 = vrot.slane %v852, %v964
      %vm966 = vcmask 917312
      %v967 = vsel %vm966, %v965, %v960
      %v968 = vadd.s32 %v872, 4294967184
      %v969 = vlaneseq
      %v970 = vshrl.u32 %v969, 7
      %v971 = vsub.s32 %v968, %v970
      %v972 = vrot.slane %v853, %v971
      %vm973 = vcmask 982912
      %v974 = vsel %vm973, %v972, %v967
      %v975 = vadd.s32 %v872, 4294967176
      %v976 = vlaneseq
      %v977 = vshrl.u32 %v976, 7
      %v978 = vsub.s32 %v975, %v977
      %v979 = vrot.slane %v854, %v978
      %vm980 = vcmask 1048512
      %v981 = vsel %vm980, %v979, %v974
      %983 = vst [vmem:[%s299] sm:$0x1] %v981
      %p984 = scmp.lt.s32.totalorder %s19, 2
      %s985 = scalar_select %p984, %s19, 2
      %s986 = scalar_lea.vmem %s7, %s985
      // Predicated region
      $region49: #{edge_decoder_pallas.1} parent=47 // pred_check
        %p987 = pneg %p194
      $region50: #{edge_decoder_pallas.1} parent=47 // pred_check_branch
        %989 = sbr.rel (%p987) target = $region52
      $region51: #{edge_decoder_pallas.1} parent=47 // pred_region
        _
      $region52: #{edge_decoder_pallas.1} parent=47 // pred_fallthru
        _
    $region48: #{edge_decoder_pallas.1} parent=5 // pred_fallthru
      _
    %p990 = scmp.le.s32.totalorder 2, %s14
    // Predicated region
    $region53: #{edge_decoder_pallas.1} parent=5 // pred_check
      %p991 = pneg %p990
    $region54: #{edge_decoder_pallas.1} parent=5 // pred_check_branch
      %993 = sbr.rel (%p991) target = $region56
    $region55: #{edge_decoder_pallas.1} parent=5 // pred_region
      %s994 = ssub.s32 %s14, 2
      // Predicated region
      $region57: #{edge_decoder_pallas.1} parent=55 // pred_check
        %p995 = pneg %p200
      $region58: #{edge_decoder_pallas.1} parent=55 // pred_check_branch
        %997 = sbr.rel (%p995) target = $region60
      $region59: #{edge_decoder_pallas.1} parent=55 // pred_region
        %p998 = scmp.lt.s32.totalorder %s20, 2
        %s999 = scalar_select %p998, %s20, 2
        %s1000 = scalar_lea.vmem %s7, %s999
      $region60: #{edge_decoder_pallas.1} parent=55 // pred_fallthru
        _
    $region56: #{edge_decoder_pallas.1} parent=5 // pred_fallthru
      _
  $region6: #{edge_decoder_pallas.1} parent=0 // loop_footer
    %s18 = sadd.s32 1, %s14
  $region7: #{edge_decoder_pallas.1} parent=0 // loop_footer_branch
    %13 = sbr.rel target = $region3
  $region8: #{edge_decoder_pallas.1} parent=0 // loop_exit
    _

</llo_original>
